<compile_context>
chip_gen: v7x
topology: tpu7x:2x2x1
jax: 0.10.0
libtpu: 0.0.40
codegen_flags: <defaults>
</compile_context>

<pallas_src>
import functools
import math

import jax
import jax.numpy as jnp
from jax import lax
from jax.experimental import pallas as pl
from jax.experimental.pallas import tpu as pltpu


LN_EPS = 1e-5  # PyTorch nn.LayerNorm default


def _round_up(x, m):
    return ((x + m - 1) // m) * m


# ---------------------------------------------------------------------------
# Fused kernel: all hidden layers + final linear in one body.
# refs = (x_ref, [w, b, gamma, beta] * n_hidden, w_final, b_final, o_ref)
# ---------------------------------------------------------------------------
def _fused_mlp_kernel(*refs, hidden_dims, compute_dtype):
    x_ref = refs[0]
    o_ref = refs[-1]
    p = refs[1:-1]

    h = x_ref[...]  # (bm, D0_pad) compute_dtype; padded cols are exact zeros
    i = 0
    for H in hidden_dims:
        w_ref, b_ref, g_ref, be_ref = p[i], p[i + 1], p[i + 2], p[i + 3]
        i += 4
        # Matmul on the MXU in bf16, accumulate in f32.
        y = jnp.dot(h.astype(compute_dtype), w_ref[...],
                    preferred_element_type=jnp.float32)
        y = y + b_ref[...]                      # (bm, Hp) + (1, Hp), f32

        # Single-pass LayerNorm statistics (sum + sumsq, XLU).
        # Padded columns of y are exactly 0, so sums over the padded width
        # equal sums over the logical width; divide by logical H.
        inv_h = jnp.float32(1.0 / H)
        s = jnp.sum(y, axis=-1, keepdims=True)
        ss = jnp.sum(y * y, axis=-1, keepdims=True)
        mean = s * inv_h
        var = jnp.maximum(ss * inv_h - mean * mean, 0.0)  # biased var (PyTorch LN)

        y = (y - mean) * lax.rsqrt(var + LN_EPS)
        y = y * g_ref[...] + be_ref[...]        # gamma/beta zero-padded -> padded cols back to 0
        h = jnp.maximum(y, 0.0)                 # ReLU (f32)

    w_ref, b_ref = p[i], p[i + 1]
    y = jnp.dot(h.astype(compute_dtype), w_ref[...],
                preferred_element_type=jnp.float32)
    # Single fused store of the epilogue result (one lane-dense vst per tile).
    o_ref[...] = (y + b_ref[...]).astype(o_ref.dtype)


# ---------------------------------------------------------------------------
# Wrapper: pad to lane-dense shapes, build the batch-tiled grid, call once.
# ---------------------------------------------------------------------------
def mlp_forward(params, x, *, bm=256, compute_dtype=jnp.bfloat16):
    B, d_in = x.shape
    hidden = [p for p in params if p[0] == "hidden"]
    final = params[-1]
    hidden_dims = [int(p[1].shape[1]) for p in hidden]
    output_dim = int(final[1].shape[1])

    # Lane-dense feature dims (multiples of 128); batch padded to the tile.
    dims = [d_in] + hidden_dims + [output_dim]
    pdims = [_round_up(d, 128) for d in dims]
    B8 = _round_up(B, 8)
    bm_eff = min(bm, B8)
    B_pad = _round_up(B, bm_eff)

    # Zero-pad the input activations; stream them in the compute dtype
    # (bf16) to halve the HBM read traffic for x.
    x_pad = jnp.zeros((B_pad, pdims[0]), compute_dtype)
    x_pad = x_pad.at[:B, :d_in].set(x.astype(compute_dtype))

    flat_args = [x_pad]
    in_specs = [pl.BlockSpec((bm_eff, pdims[0]), lambda i: (i, 0))]

    def resident_spec(shape):
        # Same block every grid step -> parameter stays VMEM-resident.
        return pl.BlockSpec(shape, lambda i: (0, 0))

    li = 0
    for (_, w, b, g, be) in hidden:
        din_p, dout_p = pdims[li], pdims[li + 1]
        w_p = jnp.zeros((din_p, dout_p), compute_dtype)
        w_p = w_p.at[: w.shape[0], : w.shape[1]].set(w.astype(compute_dtype))
        b_p = jnp.zeros((1, dout_p), jnp.float32).at[:, : b.shape[1]].set(b)
        # gamma/beta padded with ZEROS so padded columns stay 0 after affine.
        g_p = jnp.zeros((1, dout_p), jnp.float32).at[:, : g.shape[1]].set(g)
        be_p = jnp.zeros((1, dout_p), jnp.float32).at[:, : be.shape[1]].set(be)
        flat_args += [w_p, b_p, g_p, be_p]
        in_specs += [
            resident_spec((din_p, dout_p)),
            resident_spec((1, dout_p)),
            resident_spec((1, dout_p)),
            resident_spec((1, dout_p)),
        ]
        li += 1

    _, wf, bf = final
    din_p, dout_p = pdims[li], pdims[li + 1]
    wf_p = jnp.zeros((din_p, dout_p), compute_dtype)
    wf_p = wf_p.at[: wf.shape[0], : wf.shape[1]].set(wf.astype(compute_dtype))
    bf_p = jnp.zeros((1, dout_p), jnp.float32).at[:, : bf.shape[1]].set(bf)
    flat_args += [wf_p, bf_p]
    in_specs += [resident_spec((din_p, dout_p)), resident_spec((1, dout_p))]

    out_spec = pl.BlockSpec((bm_eff, pdims[-1]), lambda i: (i, 0))
    grid = (B_pad // bm_eff,)

    # VMEM budget: resident params + double-buffered activation tiles (+slack).
    param_bytes = sum(int(a.size) * a.dtype.itemsize for a in flat_args[1:])
    act_bytes = 2 * bm_eff * (
        pdims[0] * jnp.dtype(compute_dtype).itemsize + pdims[-1] * 4
    )
    vmem_limit = int(min(max(param_bytes + act_bytes + (8 << 20), 32 << 20), 100 << 20))

    # Advisory cost estimate for the XLA scheduler.
    flops = int(2 * B_pad * sum(pdims[i] * pdims[i + 1] for i in range(len(pdims) - 1)))
    bytes_accessed = int(
        x_pad.size * x_pad.dtype.itemsize + param_bytes + B_pad * pdims[-1] * 4
    )
    transcendentals = int(B_pad * len(hidden_dims))  # rsqrt per row per LayerNorm

    kernel = functools.partial(
        _fused_mlp_kernel,
        hidden_dims=tuple(hidden_dims),
        compute_dtype=compute_dtype,
    )

    out_pad = pl.pallas_call(
        kernel,
        out_shape=jax.ShapeDtypeStruct((B_pad, pdims[-1]), jnp.float32),
        grid=grid,
        in_specs=in_specs,
        out_specs=out_spec,
        compiler_params=pltpu.CompilerParams(
            dimension_semantics=("parallel",),
            vmem_limit_bytes=vmem_limit,
        ),
        cost_estimate=pl.CostEstimate(
            flops=flops,
            transcendentals=transcendentals,
            bytes_accessed=bytes_accessed,
        ),
    )(*flat_args)

    return out_pad[:B, :output_dim]


# ---------------------------------------------------------------------------
# Parameter init (matches PyTorch: xavier_uniform_ weights, default Linear bias,
# LayerNorm weight=1 / bias=0). Stored unpadded, f32, layout (in, out).
# ---------------------------------------------------------------------------
def init_params(key, input_dim, output_dim, hidden_dims):
    params = []
    current_dim = input_dim
    for hidden_dim in hidden_dims:
        key, kw, kb = jax.random.split(key, 3)
        bound_w = math.sqrt(6.0 / (current_dim + hidden_dim))     # xavier_uniform_
        w = jax.random.uniform(kw, (current_dim, hidden_dim), jnp.float32,
                               -bound_w, bound_w)
        bound_b = 1.0 / math.sqrt(current_dim)                    # nn.Linear default bias
        b = jax.random.uniform(kb, (1, hidden_dim), jnp.float32, -bound_b, bound_b)
        gamma = jnp.ones((1, hidden_dim), jnp.float32)
        beta = jnp.zeros((1, hidden_dim), jnp.float32)
        params.append(("hidden", w, b, gamma, beta))
        current_dim = hidden_dim
    key, kw, kb = jax.random.split(key, 3)
    bound_w = math.sqrt(6.0 / (current_dim + output_dim))
    w = jax.random.uniform(kw, (current_dim, output_dim), jnp.float32,
                           -bound_w, bound_w)
    bound_b = 1.0 / math.sqrt(current_dim)
    b = jax.random.uniform(kb, (1, output_dim), jnp.float32, -bound_b, bound_b)
    params.append(("final", w, b))
    return params


# Pure-JAX reference mirroring the kernel math (bf16 matmul, f32 LN) on
# unpadded params, for correctness checking.
def mlp_reference(params, x, compute_dtype=jnp.bfloat16):
    h = x.astype(jnp.float32)
    for p in params:
        if p[0] == "hidden":
            _, w, b, g, be = p
            y = jnp.dot(h.astype(compute_dtype), w.astype(compute_dtype),
                        preferred_element_type=jnp.float32) + b
            H = w.shape[1]
            inv_h = jnp.float32(1.0 / H)
            s = jnp.sum(y, axis=-1, keepdims=True)
            ss = jnp.sum(y * y, axis=-1, keepdims=True)
            mean = s * inv_h
            var = jnp.maximum(ss * inv_h - mean * mean, 0.0)
            y = (y - mean) * lax.rsqrt(var + LN_EPS)
            y = y * g + be
            h = jnp.maximum(y, 0.0)
        else:
            _, w, b = p
            h = jnp.dot(h.astype(compute_dtype), w.astype(compute_dtype),
                        preferred_element_type=jnp.float32) + b
    return h


if __name__ == "__main__":
    batch = 2
    input_dim = 16
    hidden_dims = [32, 32]
    output_dim = 8

    key = jax.random.PRNGKey(0)
    key, kx = jax.random.split(key)
    x = jax.random.normal(kx, (batch, input_dim), jnp.float32)

    params = init_params(key, input_dim, output_dim, hidden_dims)

    out = mlp_forward(params, x)
    out = jax.block_until_ready(out)

    ref = mlp_reference(params, x)
    assert out.shape == (batch, output_dim)
    assert jnp.allclose(out, ref, atol=1e-3, rtol=1e-3), float(
        jnp.max(jnp.abs(out - ref))
    )

    print("KERNEL_OK")
</pallas_src>

<mosaic_0001>
module attributes {stable_mosaic.version = 11 : i64} {
  func.func @_fused_mlp_kernel(%arg0: i32, %arg1: memref<8x128xbf16, #tpu.memory_space<vmem>>, %arg2: memref<128x128xbf16, #tpu.memory_space<vmem>>, %arg3: memref<1x128xf32, #tpu.memory_space<vmem>>, %arg4: memref<1x128xf32, #tpu.memory_space<vmem>>, %arg5: memref<1x128xf32, #tpu.memory_space<vmem>>, %arg6: memref<128x128xbf16, #tpu.memory_space<vmem>>, %arg7: memref<1x128xf32, #tpu.memory_space<vmem>>, %arg8: memref<1x128xf32, #tpu.memory_space<vmem>>, %arg9: memref<1x128xf32, #tpu.memory_space<vmem>>, %arg10: memref<128x128xbf16, #tpu.memory_space<vmem>>, %arg11: memref<1x128xf32, #tpu.memory_space<vmem>>, %arg12: memref<8x128xf32, #tpu.memory_space<vmem>>) attributes {dimension_semantics = [#tpu.dimension_semantics<parallel>], iteration_bounds = array<i64: 1>, scalar_prefetch = 0 : i64, scratch_operands = 0 : i64, tpu.core_type = #tpu.core_type<tc>, window_params = [{transform_indices = @transform_0, window_bounds = array<i64: 8, 128>}, {pipeline_mode = #tpu.pipeline_mode<synchronous>, transform_indices = @transform_1, window_bounds = array<i64: 128, 128>}, {pipeline_mode = #tpu.pipeline_mode<synchronous>, transform_indices = @transform_2, window_bounds = array<i64: 1, 128>}, {pipeline_mode = #tpu.pipeline_mode<synchronous>, transform_indices = @transform_3, window_bounds = array<i64: 1, 128>}, {pipeline_mode = #tpu.pipeline_mode<synchronous>, transform_indices = @transform_4, window_bounds = array<i64: 1, 128>}, {pipeline_mode = #tpu.pipeline_mode<synchronous>, transform_indices = @transform_5, window_bounds = array<i64: 128, 128>}, {pipeline_mode = #tpu.pipeline_mode<synchronous>, transform_indices = @transform_6, window_bounds = array<i64: 1, 128>}, {pipeline_mode = #tpu.pipeline_mode<synchronous>, transform_indices = @transform_7, window_bounds = array<i64: 1, 128>}, {pipeline_mode = #tpu.pipeline_mode<synchronous>, transform_indices = @transform_8, window_bounds = array<i64: 1, 128>}, {pipeline_mode = #tpu.pipeline_mode<synchronous>, transform_indices = @transform_9, window_bounds = array<i64: 128, 128>}, {pipeline_mode = #tpu.pipeline_mode<synchronous>, transform_indices = @transform_10, window_bounds = array<i64: 1, 128>}, {transform_indices = @transform_11, window_bounds = array<i64: 8, 128>}]} {
    %c0 = arith.constant 0 : index
    %c0_0 = arith.constant 0 : index
    %0 = vector.load %arg1[%c0, %c0_0] : memref<8x128xbf16, #tpu.memory_space<vmem>>, vector<8x128xbf16>
    %c0_1 = arith.constant 0 : index
    %c0_2 = arith.constant 0 : index
    %1 = vector.load %arg2[%c0_1, %c0_2] : memref<128x128xbf16, #tpu.memory_space<vmem>>, vector<128x128xbf16>
    %cst = arith.constant dense<0.000000e+00> : vector<8x128xf32>
    %2 = tpu.matmul %0, %1, %cst {dimension_numbers = #tpu.dot_dimension_numbers<[1], [0], [0], [1], [0, 0, 1, 1], [], []>} : vector<8x128xbf16>, vector<128x128xbf16>, vector<8x128xf32> -> vector<8x128xf32>
    %c0_3 = arith.constant 0 : index
    %c0_4 = arith.constant 0 : index
    %3 = vector.load %arg3[%c0_3, %c0_4] : memref<1x128xf32, #tpu.memory_space<vmem>>, vector<1x128xf32>
    %4 = vector.broadcast %3 : vector<1x128xf32> to vector<8x128xf32>
    %5 = arith.addf %2, %4 : vector<8x128xf32>
    %cst_5 = arith.constant dense<0.000000e+00> : vector<8xf32>
    %6 = vector.multi_reduction <add>, %5, %cst_5 [1] : vector<8x128xf32> to vector<8xf32>
    %7 = vector.shape_cast %6 : vector<8xf32> to vector<8x1xf32>
    %8 = arith.mulf %5, %5 : vector<8x128xf32>
    %cst_6 = arith.constant dense<0.000000e+00> : vector<8xf32>
    %9 = vector.multi_reduction <add>, %8, %cst_6 [1] : vector<8x128xf32> to vector<8xf32>
    %10 = vector.shape_cast %9 : vector<8xf32> to vector<8x1xf32>
    %cst_7 = arith.constant 3.125000e-02 : f32
    %11 = vector.broadcast %cst_7 : f32 to vector<8x1xf32>
    %12 = arith.mulf %7, %11 : vector<8x1xf32>
    %cst_8 = arith.constant 3.125000e-02 : f32
    %13 = vector.broadcast %cst_8 : f32 to vector<8x1xf32>
    %14 = arith.mulf %10, %13 : vector<8x1xf32>
    %15 = arith.mulf %12, %12 : vector<8x1xf32>
    %16 = arith.subf %14, %15 : vector<8x1xf32>
    %cst_9 = arith.constant 0.000000e+00 : f32
    %17 = vector.broadcast %cst_9 : f32 to vector<8x1xf32>
    %18 = arith.maximumf %16, %17 : vector<8x1xf32>
    %19 = vector.broadcast %12 : vector<8x1xf32> to vector<8x128xf32>
    %20 = arith.subf %5, %19 : vector<8x128xf32>
    %cst_10 = arith.constant 9.99999974E-6 : f32
    %21 = vector.broadcast %cst_10 : f32 to vector<8x1xf32>
    %22 = arith.addf %18, %21 : vector<8x1xf32>
    %23 = math.rsqrt %22 : vector<8x1xf32>
    %24 = vector.broadcast %23 : vector<8x1xf32> to vector<8x128xf32>
    %25 = arith.mulf %20, %24 : vector<8x128xf32>
    %c0_11 = arith.constant 0 : index
    %c0_12 = arith.constant 0 : index
    %26 = vector.load %arg4[%c0_11, %c0_12] : memref<1x128xf32, #tpu.memory_space<vmem>>, vector<1x128xf32>
    %27 = vector.broadcast %26 : vector<1x128xf32> to vector<8x128xf32>
    %28 = arith.mulf %25, %27 : vector<8x128xf32>
    %c0_13 = arith.constant 0 : index
    %c0_14 = arith.constant 0 : index
    %29 = vector.load %arg5[%c0_13, %c0_14] : memref<1x128xf32, #tpu.memory_space<vmem>>, vector<1x128xf32>
    %30 = vector.broadcast %29 : vector<1x128xf32> to vector<8x128xf32>
    %31 = arith.addf %28, %30 : vector<8x128xf32>
    %cst_15 = arith.constant 0.000000e+00 : f32
    %32 = vector.broadcast %cst_15 : f32 to vector<8x128xf32>
    %33 = arith.maximumf %31, %32 : vector<8x128xf32>
    %34 = arith.truncf %33 : vector<8x128xf32> to vector<8x128xbf16>
    %c0_16 = arith.constant 0 : index
    %c0_17 = arith.constant 0 : index
    %35 = vector.load %arg6[%c0_16, %c0_17] : memref<128x128xbf16, #tpu.memory_space<vmem>>, vector<128x128xbf16>
    %cst_18 = arith.constant dense<0.000000e+00> : vector<8x128xf32>
    %36 = tpu.matmul %34, %35, %cst_18 {dimension_numbers = #tpu.dot_dimension_numbers<[1], [0], [0], [1], [0, 0, 1, 1], [], []>} : vector<8x128xbf16>, vector<128x128xbf16>, vector<8x128xf32> -> vector<8x128xf32>
    %c0_19 = arith.constant 0 : index
    %c0_20 = arith.constant 0 : index
    %37 = vector.load %arg7[%c0_19, %c0_20] : memref<1x128xf32, #tpu.memory_space<vmem>>, vector<1x128xf32>
    %38 = vector.broadcast %37 : vector<1x128xf32> to vector<8x128xf32>
    %39 = arith.addf %36, %38 : vector<8x128xf32>
    %cst_21 = arith.constant dense<0.000000e+00> : vector<8xf32>
    %40 = vector.multi_reduction <add>, %39, %cst_21 [1] : vector<8x128xf32> to vector<8xf32>
    %41 = vector.shape_cast %40 : vector<8xf32> to vector<8x1xf32>
    %42 = arith.mulf %39, %39 : vector<8x128xf32>
    %cst_22 = arith.constant dense<0.000000e+00> : vector<8xf32>
    %43 = vector.multi_reduction <add>, %42, %cst_22 [1] : vector<8x128xf32> to vector<8xf32>
    %44 = vector.shape_cast %43 : vector<8xf32> to vector<8x1xf32>
    %cst_23 = arith.constant 3.125000e-02 : f32
    %45 = vector.broadcast %cst_23 : f32 to vector<8x1xf32>
    %46 = arith.mulf %41, %45 : vector<8x1xf32>
    %cst_24 = arith.constant 3.125000e-02 : f32
    %47 = vector.broadcast %cst_24 : f32 to vector<8x1xf32>
    %48 = arith.mulf %44, %47 : vector<8x1xf32>
    %49 = arith.mulf %46, %46 : vector<8x1xf32>
    %50 = arith.subf %48, %49 : vector<8x1xf32>
    %cst_25 = arith.constant 0.000000e+00 : f32
    %51 = vector.broadcast %cst_25 : f32 to vector<8x1xf32>
    %52 = arith.maximumf %50, %51 : vector<8x1xf32>
    %53 = vector.broadcast %46 : vector<8x1xf32> to vector<8x128xf32>
    %54 = arith.subf %39, %53 : vector<8x128xf32>
    %cst_26 = arith.constant 9.99999974E-6 : f32
    %55 = vector.broadcast %cst_26 : f32 to vector<8x1xf32>
    %56 = arith.addf %52, %55 : vector<8x1xf32>
    %57 = math.rsqrt %56 : vector<8x1xf32>
    %58 = vector.broadcast %57 : vector<8x1xf32> to vector<8x128xf32>
    %59 = arith.mulf %54, %58 : vector<8x128xf32>
    %c0_27 = arith.constant 0 : index
    %c0_28 = arith.constant 0 : index
    %60 = vector.load %arg8[%c0_27, %c0_28] : memref<1x128xf32, #tpu.memory_space<vmem>>, vector<1x128xf32>
    %61 = vector.broadcast %60 : vector<1x128xf32> to vector<8x128xf32>
    %62 = arith.mulf %59, %61 : vector<8x128xf32>
    %c0_29 = arith.constant 0 : index
    %c0_30 = arith.constant 0 : index
    %63 = vector.load %arg9[%c0_29, %c0_30] : memref<1x128xf32, #tpu.memory_space<vmem>>, vector<1x128xf32>
    %64 = vector.broadcast %63 : vector<1x128xf32> to vector<8x128xf32>
    %65 = arith.addf %62, %64 : vector<8x128xf32>
    %cst_31 = arith.constant 0.000000e+00 : f32
    %66 = vector.broadcast %cst_31 : f32 to vector<8x128xf32>
    %67 = arith.maximumf %65, %66 : vector<8x128xf32>
    %68 = arith.truncf %67 : vector<8x128xf32> to vector<8x128xbf16>
    %c0_32 = arith.constant 0 : index
    %c0_33 = arith.constant 0 : index
    %69 = vector.load %arg10[%c0_32, %c0_33] : memref<128x128xbf16, #tpu.memory_space<vmem>>, vector<128x128xbf16>
    %cst_34 = arith.constant dense<0.000000e+00> : vector<8x128xf32>
    %70 = tpu.matmul %68, %69, %cst_34 {dimension_numbers = #tpu.dot_dimension_numbers<[1], [0], [0], [1], [0, 0, 1, 1], [], []>} : vector<8x128xbf16>, vector<128x128xbf16>, vector<8x128xf32> -> vector<8x128xf32>
    %c0_35 = arith.constant 0 : index
    %c0_36 = arith.constant 0 : index
    %71 = vector.load %arg11[%c0_35, %c0_36] : memref<1x128xf32, #tpu.memory_space<vmem>>, vector<1x128xf32>
    %72 = vector.broadcast %71 : vector<1x128xf32> to vector<8x128xf32>
    %73 = arith.addf %70, %72 : vector<8x128xf32>
    %c0_37 = arith.constant 0 : index
    %c0_38 = arith.constant 0 : index
    %74 = vector.load %arg12[%c0_37, %c0_38] : memref<8x128xf32, #tpu.memory_space<vmem>>, vector<8x128xf32>
    tpu.vector_store %arg12[%c0_37, %c0_38], %73 {strides = array<i32>} : memref<8x128xf32, #tpu.memory_space<vmem>>, vector<8x128xf32>,
    return
  }
  func.func @transform_0(%arg0: i32) -> (i32, i32) {
    %c0_i32 = arith.constant 0 : i32
    %c0_i32_0 = arith.constant 0 : i32
    return %arg0, %c0_i32 : i32, i32
  }
  func.func @transform_1(%arg0: i32) -> (i32, i32) {
    %c0_i32 = arith.constant 0 : i32
    %c0_i32_0 = arith.constant 0 : i32
    %c0_i32_1 = arith.constant 0 : i32
    return %c0_i32, %c0_i32_0 : i32, i32
  }
  func.func @transform_2(%arg0: i32) -> (i32, i32) {
    %c0_i32 = arith.constant 0 : i32
    %c0_i32_0 = arith.constant 0 : i32
    %c0_i32_1 = arith.constant 0 : i32
    return %c0_i32, %c0_i32_0 : i32, i32
  }
  func.func @transform_3(%arg0: i32) -> (i32, i32) {
    %c0_i32 = arith.constant 0 : i32
    %c0_i32_0 = arith.constant 0 : i32
    %c0_i32_1 = arith.constant 0 : i32
    return %c0_i32, %c0_i32_0 : i32, i32
  }
  func.func @transform_4(%arg0: i32) -> (i32, i32) {
    %c0_i32 = arith.constant 0 : i32
    %c0_i32_0 = arith.constant 0 : i32
    %c0_i32_1 = arith.constant 0 : i32
    return %c0_i32, %c0_i32_0 : i32, i32
  }
  func.func @transform_5(%arg0: i32) -> (i32, i32) {
    %c0_i32 = arith.constant 0 : i32
    %c0_i32_0 = arith.constant 0 : i32
    %c0_i32_1 = arith.constant 0 : i32
    return %c0_i32, %c0_i32_0 : i32, i32
  }
  func.func @transform_6(%arg0: i32) -> (i32, i32) {
    %c0_i32 = arith.constant 0 : i32
    %c0_i32_0 = arith.constant 0 : i32
    %c0_i32_1 = arith.constant 0 : i32
    return %c0_i32, %c0_i32_0 : i32, i32
  }
  func.func @transform_7(%arg0: i32) -> (i32, i32) {
    %c0_i32 = arith.constant 0 : i32
    %c0_i32_0 = arith.constant 0 : i32
    %c0_i32_1 = arith.constant 0 : i32
    return %c0_i32, %c0_i32_0 : i32, i32
  }
  func.func @transform_8(%arg0: i32) -> (i32, i32) {
    %c0_i32 = arith.constant 0 : i32
    %c0_i32_0 = arith.constant 0 : i32
    %c0_i32_1 = arith.constant 0 : i32
    return %c0_i32, %c0_i32_0 : i32, i32
  }
  func.func @transform_9(%arg0: i32) -> (i32, i32) {
    %c0_i32 = arith.constant 0 : i32
    %c0_i32_0 = arith.constant 0 : i32
    %c0_i32_1 = arith.constant 0 : i32
    return %c0_i32, %c0_i32_0 : i32, i32
  }
  func.func @transform_10(%arg0: i32) -> (i32, i32) {
    %c0_i32 = arith.constant 0 : i32
    %c0_i32_0 = arith.constant 0 : i32
    %c0_i32_1 = arith.constant 0 : i32
    return %c0_i32, %c0_i32_0 : i32, i32
  }
  func.func @transform_11(%arg0: i32) -> (i32, i32) {
    %c0_i32 = arith.constant 0 : i32
    %c0_i32_0 = arith.constant 0 : i32
    return %arg0, %c0_i32 : i32, i32
  }
}

</mosaic_0001>

<llo_original>
// kernel: tpu_custom_call.1
$region0: #{tpu_custom_call.1}
  #allocation0 [shape = 'u32[]', space=smem, size = 0x4, offset = 0x4, fixed_abs, tag = 'smem constant byte address 0x4 - core index']
  #allocation1 [shape = 'u32[144,128]{1,0:T(1,128)}', space=vmem, size = 0x12000, scoped, tag = 'internal scratch']
  %s0 = inlined_call_operand.hbm [shape: bf16[8,128], index: 0, kind: input, shape index: {}]
  %s1 = inlined_call_operand.hbm [shape: bf16[128,128], index: 1, kind: input, shape index: {}]
  %s2 = inlined_call_operand.vmem [shape: f32[1,128], index: 2, kind: input, shape index: {}]
  %s3 = inlined_call_operand.vmem [shape: f32[1,128], index: 3, kind: input, shape index: {}]
  %s4 = inlined_call_operand.vmem [shape: f32[1,128], index: 4, kind: input, shape index: {}]
  %s5 = inlined_call_operand.hbm [shape: bf16[128,128], index: 5, kind: input, shape index: {}]
  %s6 = inlined_call_operand.vmem [shape: f32[1,128], index: 6, kind: input, shape index: {}]
  %s7 = inlined_call_operand.vmem [shape: f32[1,128], index: 7, kind: input, shape index: {}]
  %s8 = inlined_call_operand.vmem [shape: f32[1,128], index: 8, kind: input, shape index: {}]
  %s9 = inlined_call_operand.hbm [shape: bf16[128,128], index: 9, kind: input, shape index: {}]
  %s10 = inlined_call_operand.vmem [shape: f32[1,128], index: 10, kind: input, shape index: {}]
  %s11 = inlined_call_operand.hbm [shape: f32[8,128], index: 11, kind: output, shape index: {}]
  %s12 = sld [smem:[#allocation0]]
  $region70: #{tpu_custom_call.1} parent=0
    _
  %s14 = ssub.s32 1, %s12
  %s15 = scalar_select 0, %s14, %s12
  $region1: #{tpu_custom_call.1} parent=0
    #allocation2 [shape = 'u8[2048]{0}', space=vmem, size = 0x800, scoped, tag = 'input window, operand 0, single buffered']
    #allocation3 [shape = 's32[1]{0}', space=sflag, size = 0x4, scoped, tag = 'scoped memory for tpu_custom_call.1']
    #allocation4 [shape = 's32[1]{0}', space=sflag, size = 0x4, scoped, tag = 'scoped memory for tpu_custom_call.1']
    #allocation5 [shape = 'u8[32768]{0}', space=vmem, size = 0x8000, scoped, tag = 'input window, operand 1, single buffered']
    #allocation6 [shape = 's32[1]{0}', space=sflag, size = 0x4, scoped, tag = 'scoped memory for tpu_custom_call.1']
    #allocation7 [shape = 'u8[32768]{0}', space=vmem, size = 0x8000, scoped, tag = 'input window, operand 5, single buffered']
    #allocation8 [shape = 'u8[32768]{0}', space=vmem, size = 0x8000, scoped, tag = 'input window, operand 9, single buffered']
    #allocation9 [shape = 's32[1]{0}', space=sflag, size = 0x4, scoped, tag = 'scoped memory for tpu_custom_call.1']
    #allocation10 [shape = 'u8[4096]{0}', space=vmem, size = 0x1000, scoped, tag = 'output window, operand 0, single buffered']
    %16 = vsyncpa [#allocation3], 0
    %17 = vsyncpa [#allocation6], 0
    %18 = vsyncpa [#allocation9], 0
    %19 = vsyncpa [#allocation4], 0
    // Predicated region
    $region2: #{tpu_custom_call.1} parent=1 // pred_check
      _
    $region3: #{tpu_custom_call.1} parent=1 // pred_check_branch
      %21 = sbr.rel (0) target = $region5
    $region4: #{tpu_custom_call.1} parent=1 // pred_region
      %s23 = ssub.s32 64, 64
      %24 = vsyncadd [#allocation3], %s23
      %s26 = sshll.u32 [#allocation2], 4
      %s27 = int_to_ptr.vmem [resolvable:$true] %s26
      %29 = dma.hbm_to_vmem [thread:$0]  %s0, 64, %s27, [#allocation3]
    $region5: #{tpu_custom_call.1} parent=1 // pred_fallthru
      _
    // Predicated region
    $region6: #{tpu_custom_call.1} parent=1 // pred_check
      _
    $region7: #{tpu_custom_call.1} parent=1 // pred_check_branch
      %31 = sbr.rel (0) target = $region9
    $region8: #{tpu_custom_call.1} parent=1 // pred_region
      %s33 = ssub.s32 1024, 1024
      %34 = vsyncadd [#allocation6], %s33
      %s35 = sshll.u32 [#allocation5], 4
      %s36 = int_to_ptr.vmem [resolvable:$true] %s35
      %41 = dma.hbm_to_vmem [thread:$0]  %s1, 1024, %s36, [#allocation6], 64, 64, 4
    $region9: #{tpu_custom_call.1} parent=1 // pred_fallthru
      _
    // Predicated region
    $region10: #{tpu_custom_call.1} parent=1 // pred_check
      _
    $region11: #{tpu_custom_call.1} parent=1 // pred_check_branch
      %43 = sbr.rel (0) target = $region13
    $region12: #{tpu_custom_call.1} parent=1 // pred_region
      _
    $region13: #{tpu_custom_call.1} parent=1 // pred_fallthru
      _
    // Predicated region
    $region14: #{tpu_custom_call.1} parent=1 // pred_check
      _
    $region15: #{tpu_custom_call.1} parent=1 // pred_check_branch
      %45 = sbr.rel (0) target = $region17
    $region16: #{tpu_custom_call.1} parent=1 // pred_region
      _
    $region17: #{tpu_custom_call.1} parent=1 // pred_fallthru
      _
    // Predicated region
    $region18: #{tpu_custom_call.1} parent=1 // pred_check
      _
    $region19: #{tpu_custom_call.1} parent=1 // pred_check_branch
      %47 = sbr.rel (0) target = $region21
    $region20: #{tpu_custom_call.1} parent=1 // pred_region
      _
    $region21: #{tpu_custom_call.1} parent=1 // pred_fallthru
      _
    // Predicated region
    $region22: #{tpu_custom_call.1} parent=1 // pred_check
      _
    $region23: #{tpu_custom_call.1} parent=1 // pred_check_branch
      %49 = sbr.rel (0) target = $region25
    $region24: #{tpu_custom_call.1} parent=1 // pred_region
      %s51 = ssub.s32 1024, 1024
      %52 = vsyncadd [#allocation6], %s51
      %s53 = sshll.u32 [#allocation7], 4
      %s54 = int_to_ptr.vmem [resolvable:$true] %s53
      %59 = dma.hbm_to_vmem [thread:$0]  %s5, 1024, %s54, [#allocation6], 64, 64, 4
    $region25: #{tpu_custom_call.1} parent=1 // pred_fallthru
      _
    // Predicated region
    $region26: #{tpu_custom_call.1} parent=1 // pred_check
      _
    $region27: #{tpu_custom_call.1} parent=1 // pred_check_branch
      %61 = sbr.rel (0) target = $region29
    $region28: #{tpu_custom_call.1} parent=1 // pred_region
      _
    $region29: #{tpu_custom_call.1} parent=1 // pred_fallthru
      _
    // Predicated region
    $region30: #{tpu_custom_call.1} parent=1 // pred_check
      _
    $region31: #{tpu_custom_call.1} parent=1 // pred_check_branch
      %63 = sbr.rel (0) target = $region33
    $region32: #{tpu_custom_call.1} parent=1 // pred_region
      _
    $region33: #{tpu_custom_call.1} parent=1 // pred_fallthru
      _
    // Predicated region
    $region34: #{tpu_custom_call.1} parent=1 // pred_check
      _
    $region35: #{tpu_custom_call.1} parent=1 // pred_check_branch
      %65 = sbr.rel (0) target = $region37
    $region36: #{tpu_custom_call.1} parent=1 // pred_region
      _
    $region37: #{tpu_custom_call.1} parent=1 // pred_fallthru
      _
    // Predicated region
    $region38: #{tpu_custom_call.1} parent=1 // pred_check
      _
    $region39: #{tpu_custom_call.1} parent=1 // pred_check_branch
      %67 = sbr.rel (0) target = $region41
    $region40: #{tpu_custom_call.1} parent=1 // pred_region
      %s69 = ssub.s32 1024, 1024
      %70 = vsyncadd [#allocation9], %s69
      %s71 = sshll.u32 [#allocation8], 4
      %s72 = int_to_ptr.vmem [resolvable:$true] %s71
      %77 = dma.hbm_to_vmem [thread:$0]  %s9, 1024, %s72, [#allocation9], 64, 64, 4
    $region41: #{tpu_custom_call.1} parent=1 // pred_fallthru
      _
    // Predicated region
    $region42: #{tpu_custom_call.1} parent=1 // pred_check
      _
    $region43: #{tpu_custom_call.1} parent=1 // pred_check_branch
      %79 = sbr.rel (0) target = $region45
    $region44: #{tpu_custom_call.1} parent=1 // pred_region
      _
    $region45: #{tpu_custom_call.1} parent=1 // pred_fallthru
      _
    // Predicated region
    $region46: #{tpu_custom_call.1} parent=1 // pred_check
      _
    $region47: #{tpu_custom_call.1} parent=1 // pred_check_branch
      %81 = sbr.rel (0) target = $region49
    $region48: #{tpu_custom_call.1} parent=1 // pred_region
      %82 = dma.done [#allocation3], 64
    $region49: #{tpu_custom_call.1} parent=1 // pred_fallthru
      _
    // Predicated region
    $region50: #{tpu_custom_call.1} parent=1 // pred_check
      _
    $region51: #{tpu_custom_call.1} parent=1 // pred_check_branch
      %84 = sbr.rel (0) target = $region53
    $region52: #{tpu_custom_call.1} parent=1 // pred_region
      %85 = dma.done [#allocation6], 1024
    $region53: #{tpu_custom_call.1} parent=1 // pred_fallthru
      _
    // Predicated region
    $region54: #{tpu_custom_call.1} parent=1 // pred_check
      _
    $region55: #{tpu_custom_call.1} parent=1 // pred_check_branch
      %87 = sbr.rel (0) target = $region57
    $region56: #{tpu_custom_call.1} parent=1 // pred_region
      %88 = dma.done [#allocation6], 1024
    $region57: #{tpu_custom_call.1} parent=1 // pred_fallthru
      _
    // Predicated region
    $region58: #{tpu_custom_call.1} parent=1 // pred_check
      _
    $region59: #{tpu_custom_call.1} parent=1 // pred_check_branch
      %90 = sbr.rel (0) target = $region61
    $region60: #{tpu_custom_call.1} parent=1 // pred_region
      %91 = dma.done [#allocation9], 1024
    $region61: #{tpu_custom_call.1} parent=1 // pred_fallthru
      _
    %v93 = vld [vmem:[#allocation2] sm:$0xf]
    %v94 = vld [vmem:[#allocation5] sm:$0xf]
    %v95 = vld [vmem:[#allocation5 + $0x4] sm:$0xf]
    %v96 = vld [vmem:[#allocation5 + $0x8] sm:$0xf]
    %v97 = vld [vmem:[#allocation5 + $0xc] sm:$0xf]
    %v98 = vld [vmem:[#allocation5 + $0x10] sm:$0xf]
    %v99 = vld [vmem:[#allocation5 + $0x14] sm:$0xf]
    %v100 = vld [vmem:[#allocation5 + $0x18] sm:$0xf]
    %v101 = vld [vmem:[#allocation5 + $0x1c] sm:$0xf]
    %v102 = vld [vmem:[#allocation5 + $0x20] sm:$0xf]
    %v103 = vld [vmem:[#allocation5 + $0x24] sm:$0xf]
    %v104 = vld [vmem:[#allocation5 + $0x28] sm:$0xf]
    %v105 = vld [vmem:[#allocation5 + $0x2c] sm:$0xf]
    %v106 = vld [vmem:[#allocation5 + $0x30] sm:$0xf]
    %v107 = vld [vmem:[#allocation5 + $0x34] sm:$0xf]
    %v108 = vld [vmem:[#allocation5 + $0x38] sm:$0xf]
    %v109 = vld [vmem:[#allocation5 + $0x3c] sm:$0xf]
    %v110 = vld [vmem:[%s2] sm:$0x1]
    %v112 = vlaneseq
    %v113 = vshrl.u32 %v112, 7
    %v114 = vsub.s32 0, %v113
    %v115 = vrot.slane %v110, %v114
    %v133 = vunpack.c.l.b16 %v94
    %v134 = vunpack.c.l.b16 %v95
    %v135 = vunpack.c.l.b16 %v96
    %v136 = vunpack.c.l.b16 %v97
    %v137 = vunpack.c.l.b16 %v98
    %v138 = vunpack.c.l.b16 %v99
    %v139 = vunpack.c.l.b16 %v100
    %v140 = vunpack.c.l.b16 %v101
    %v141 = vunpack.c.l.b16 %v102
    %v142 = vunpack.c.l.b16 %v103
    %v143 = vunpack.c.l.b16 %v104
    %v144 = vunpack.c.l.b16 %v105
    %v145 = vunpack.c.l.b16 %v106
    %v146 = vunpack.c.l.b16 %v107
    %v147 = vunpack.c.l.b16 %v108
    %v148 = vunpack.c.l.b16 %v109
    %v149 = vpack.c.b16 %v134, %v133
    %v150 = vpack.c.b16 %v136, %v135
    %v151 = vpack.c.b16 %v138, %v137
    %v152 = vpack.c.b16 %v140, %v139
    %v153 = vpack.c.b16 %v142, %v141
    %v154 = vpack.c.b16 %v144, %v143
    %v155 = vpack.c.b16 %v146, %v145
    %v156 = vpack.c.b16 %v148, %v147
    %165 = vmatprep.subr.bf16.mxu0 0
    %166 = vmatpush1.bf16.msra.mxu0 %v149
    %167 = vmatprep.subr.bf16.mxu0 0
    %168 = vmatpush1.bf16.msra.mxu0 %v150
    %169 = vmatprep.subr.bf16.mxu0 0
    %170 = vmatpush1.bf16.msra.mxu0 %v151
    %171 = vmatprep.subr.bf16.mxu0 0
    %172 = vmatpush1.bf16.msra.mxu0 %v152
    %173 = vmatprep.subr.bf16.mxu0 0
    %174 = vmatpush1.bf16.msra.mxu0 %v153
    %175 = vmatprep.subr.bf16.mxu0 0
    %176 = vmatpush1.bf16.msra.mxu0 %v154
    %177 = vmatprep.subr.bf16.mxu0 0
    %178 = vmatpush1.bf16.msra.mxu0 %v155
    %179 = vmatprep.subr.bf16.mxu0 0
    %180 = vmatpush1.bf16.msra.mxu0 %v156
    %181 = vmatprep.subr.bf16.mxu0 0
    %182 = vmatpush1.bf16.msra.mxu0 0
    %183 = vmatprep.subr.bf16.mxu0 0
    %184 = vmatpush1.bf16.msra.mxu0 0
    %185 = vmatprep.subr.bf16.mxu0 0
    %186 = vmatpush1.bf16.msra.mxu0 0
    %187 = vmatprep.subr.bf16.mxu0 0
    %188 = vmatpush1.bf16.msra.mxu0 0
    %189 = vmatprep.subr.bf16.mxu0 0
    %190 = vmatpush1.bf16.msra.mxu0 0
    %191 = vmatprep.subr.bf16.mxu0 0
    %192 = vmatpush1.bf16.msra.mxu0 0
    %193 = vmatprep.subr.bf16.mxu0 0
    %194 = vmatpush1.bf16.msra.mxu0 0
    %195 = vmatprep.subr.bf16.mxu0 0
    %196 = vmatpush1.bf16.msra.mxu0 0
    %197 = vmatprep.mubr.bf16.mxu0 0
    %198 = vmatmul.mubr.bf16.gmra.mrb[0].mxu0 %v93
    %v199 = vpop.f32.mrb[0].mxu0
    %v200 = vadd.f32 %v115, %v199
    %v201 = vpop.f32.mrb[0].mxu0
    %v202 = vpop.f32.mrb[0].mxu0
    %v203 = vpop.f32.mrb[0].mxu0
    %204 = vdwg.mxu0
    %205 = vadd.xlane.f32.xlu0 %v200
    %v206 = vpop.xlane.xlu0 %205
    %v207 = vmul.f32 %v200, %v200
    %208 = vadd.xlane.f32.xlu0 %v207
    %v209 = vpop.xlane.xlu0 %208
    %v210 = vmul.f32 %v206, 0.03125
    %v211 = vmul.f32 %v209, 0.03125
    %v212 = vmul.f32 %v210, %v210
    %v213 = vsub.f32 %v211, %v212
    %v214 = vmax.f32 %v213, 0.0
    %v215 = vsub.f32 %v200, %v210
    %v216 = vadd.f32 %v214, 1e-05
    %v217 = vrsqrt.pop %v216
    %v218 = vmul.f32 %v215, %v217
    %v219 = vld [vmem:[%s3] sm:$0x1]
    %v221 = vlaneseq
    %v222 = vshrl.u32 %v221, 7
    %v223 = vsub.s32 0, %v222
    %v224 = vrot.slane %v219, %v223
    %v226 = vmul.f32 %v218, %v224
    %v227 = vld [vmem:[%s4] sm:$0x1]
    %v229 = vlaneseq
    %v230 = vshrl.u32 %v229, 7
    %v231 = vsub.s32 0, %v230
    %v232 = vrot.slane %v227, %v231
    %v234 = vadd.f32 %v226, %v232
    %v235 = vmax.f32 %v234, 0.0
    %v236 = vpack.c.bf16 %v235, %v235
    %v237 = vld [vmem:[#allocation7] sm:$0xf]
    %v238 = vld [vmem:[#allocation7 + $0x4] sm:$0xf]
    %v239 = vld [vmem:[#allocation7 + $0x8] sm:$0xf]
    %v240 = vld [vmem:[#allocation7 + $0xc] sm:$0xf]
    %v241 = vld [vmem:[#allocation7 + $0x10] sm:$0xf]
    %v242 = vld [vmem:[#allocation7 + $0x14] sm:$0xf]
    %v243 = vld [vmem:[#allocation7 + $0x18] sm:$0xf]
    %v244 = vld [vmem:[#allocation7 + $0x1c] sm:$0xf]
    %v245 = vld [vmem:[#allocation7 + $0x20] sm:$0xf]
    %v246 = vld [vmem:[#allocation7 + $0x24] sm:$0xf]
    %v247 = vld [vmem:[#allocation7 + $0x28] sm:$0xf]
    %v248 = vld [vmem:[#allocation7 + $0x2c] sm:$0xf]
    %v249 = vld [vmem:[#allocation7 + $0x30] sm:$0xf]
    %v250 = vld [vmem:[#allocation7 + $0x34] sm:$0xf]
    %v251 = vld [vmem:[#allocation7 + $0x38] sm:$0xf]
    %v252 = vld [vmem:[#allocation7 + $0x3c] sm:$0xf]
    %v253 = vld [vmem:[%s6] sm:$0x1]
    %v255 = vlaneseq
    %v256 = vshrl.u32 %v255, 7
    %v257 = vsub.s32 0, %v256
    %v258 = vrot.slane %v253, %v257
    %v276 = vunpack.c.l.b16 %v237
    %v277 = vunpack.c.l.b16 %v238
    %v278 = vunpack.c.l.b16 %v239
    %v279 = vunpack.c.l.b16 %v240
    %v280 = vunpack.c.l.b16 %v241
    %v281 = vunpack.c.l.b16 %v242
    %v282 = vunpack.c.l.b16 %v243
    %v283 = vunpack.c.l.b16 %v244
    %v284 = vunpack.c.l.b16 %v245
    %v285 = vunpack.c.l.b16 %v246
    %v286 = vunpack.c.l.b16 %v247
    %v287 = vunpack.c.l.b16 %v248
    %v288 = vunpack.c.l.b16 %v249
    %v289 = vunpack.c.l.b16 %v250
    %v290 = vunpack.c.l.b16 %v251
    %v291 = vunpack.c.l.b16 %v252
    %v292 = vpack.c.b16 %v277, %v276
    %v293 = vpack.c.b16 %v279, %v278
    %v294 = vpack.c.b16 %v281, %v280
    %v295 = vpack.c.b16 %v283, %v282
    %v296 = vpack.c.b16 %v285, %v284
    %v297 = vpack.c.b16 %v287, %v286
    %v298 = vpack.c.b16 %v289, %v288
    %v299 = vpack.c.b16 %v291, %v290
    %308 = vmatprep.subr.bf16.mxu0 0
    %309 = vmatpush1.bf16.msra.mxu0 %v292
    %310 = vmatprep.subr.bf16.mxu0 0
    %311 = vmatpush1.bf16.msra.mxu0 %v293
    %312 = vmatprep.subr.bf16.mxu0 0
    %313 = vmatpush1.bf16.msra.mxu0 %v294
    %314 = vmatprep.subr.bf16.mxu0 0
    %315 = vmatpush1.bf16.msra.mxu0 %v295
    %316 = vmatprep.subr.bf16.mxu0 0
    %317 = vmatpush1.bf16.msra.mxu0 %v296
    %318 = vmatprep.subr.bf16.mxu0 0
    %319 = vmatpush1.bf16.msra.mxu0 %v297
    %320 = vmatprep.subr.bf16.mxu0 0
    %321 = vmatpush1.bf16.msra.mxu0 %v298
    %322 = vmatprep.subr.bf16.mxu0 0
    %323 = vmatpush1.bf16.msra.mxu0 %v299
    %324 = vmatprep.subr.bf16.mxu0 0
    %325 = vmatpush1.bf16.msra.mxu0 0
    %326 = vmatprep.subr.bf16.mxu0 0
    %327 = vmatpush1.bf16.msra.mxu0 0
    %328 = vmatprep.subr.bf16.mxu0 0
    %329 = vmatpush1.bf16.msra.mxu0 0
    %330 = vmatprep.subr.bf16.mxu0 0
    %331 = vmatpush1.bf16.msra.mxu0 0
    %332 = vmatprep.subr.bf16.mxu0 0
    %333 = vmatpush1.bf16.msra.mxu0 0
    %334 = vmatprep.subr.bf16.mxu0 0
    %335 = vmatpush1.bf16.msra.mxu0 0
    %336 = vmatprep.subr.bf16.mxu0 0
    %337 = vmatpush1.bf16.msra.mxu0 0
    %338 = vmatprep.subr.bf16.mxu0 0
    %339 = vmatpush1.bf16.msra.mxu0 0
    %340 = vmatprep.mubr.bf16.mxu0 0
    %341 = vmatmul.mubr.bf16.gmra.mrb[0].mxu0 %v236
    %v342 = vpop.f32.mrb[0].mxu0
    %v343 = vadd.f32 %v258, %v342
    %v344 = vpop.f32.mrb[0].mxu0
    %v345 = vpop.f32.mrb[0].mxu0
    %v346 = vpop.f32.mrb[0].mxu0
    %347 = vdwg.mxu0
    %348 = vadd.xlane.f32.xlu0 %v343
    %v349 = vpop.xlane.xlu0 %348
    %v350 = vmul.f32 %v343, %v343
    %351 = vadd.xlane.f32.xlu0 %v350
    %v352 = vpop.xlane.xlu0 %351
    %v353 = vmul.f32 %v349, 0.03125
    %v354 = vmul.f32 %v352, 0.03125
    %v355 = vmul.f32 %v353, %v353
    %v356 = vsub.f32 %v354, %v355
    %v357 = vmax.f32 %v356, 0.0
    %v358 = vsub.f32 %v343, %v353
    %v359 = vadd.f32 %v357, 1e-05
    %v360 = vrsqrt.pop %v359
    %v361 = vmul.f32 %v358, %v360
    %v362 = vld [vmem:[%s7] sm:$0x1]
    %v364 = vlaneseq
    %v365 = vshrl.u32 %v364, 7
    %v366 = vsub.s32 0, %v365
    %v367 = vrot.slane %v362, %v366
    %v369 = vmul.f32 %v361, %v367
    %v370 = vld [vmem:[%s8] sm:$0x1]
    %v372 = vlaneseq
    %v373 = vshrl.u32 %v372, 7
    %v374 = vsub.s32 0, %v373
    %v375 = vrot.slane %v370, %v374
    %v377 = vadd.f32 %v369, %v375
    %v378 = vmax.f32 %v377, 0.0
    %v379 = vpack.c.bf16 %v378, %v378
    %v380 = vld [vmem:[#allocation8] sm:$0xf]
    %v381 = vld [vmem:[#allocation8 + $0x4] sm:$0xf]
    %v382 = vld [vmem:[#allocation8 + $0x8] sm:$0xf]
    %v383 = vld [vmem:[#allocation8 + $0xc] sm:$0xf]
    %v384 = vld [vmem:[#allocation8 + $0x10] sm:$0xf]
    %v385 = vld [vmem:[#allocation8 + $0x14] sm:$0xf]
    %v386 = vld [vmem:[#allocation8 + $0x18] sm:$0xf]
    %v387 = vld [vmem:[#allocation8 + $0x1c] sm:$0xf]
    %v388 = vld [vmem:[#allocation8 + $0x20] sm:$0xf]
    %v389 = vld [vmem:[#allocation8 + $0x24] sm:$0xf]
    %v390 = vld [vmem:[#allocation8 + $0x28] sm:$0xf]
    %v391 = vld [vmem:[#allocation8 + $0x2c] sm:$0xf]
    %v392 = vld [vmem:[#allocation8 + $0x30] sm:$0xf]
    %v393 = vld [vmem:[#allocation8 + $0x34] sm:$0xf]
    %v394 = vld [vmem:[#allocation8 + $0x38] sm:$0xf]
    %v395 = vld [vmem:[#allocation8 + $0x3c] sm:$0xf]
    %v396 = vld [vmem:[%s10] sm:$0x1]
    %v398 = vlaneseq
    %v399 = vshrl.u32 %v398, 7
    %v400 = vsub.s32 0, %v399
    %v401 = vrot.slane %v396, %v400
    %v419 = vunpack.c.l.b16 %v380
    %v420 = vunpack.c.l.b16 %v381
    %v421 = vunpack.c.l.b16 %v382
    %v422 = vunpack.c.l.b16 %v383
    %v423 = vunpack.c.l.b16 %v384
    %v424 = vunpack.c.l.b16 %v385
    %v425 = vunpack.c.l.b16 %v386
    %v426 = vunpack.c.l.b16 %v387
    %v427 = vunpack.c.l.b16 %v388
    %v428 = vunpack.c.l.b16 %v389
    %v429 = vunpack.c.l.b16 %v390
    %v430 = vunpack.c.l.b16 %v391
    %v431 = vunpack.c.l.b16 %v392
    %v432 = vunpack.c.l.b16 %v393
    %v433 = vunpack.c.l.b16 %v394
    %v434 = vunpack.c.l.b16 %v395
    %v435 = vpack.c.b16 %v420, %v419
    %v436 = vpack.c.b16 %v422, %v421
    %v437 = vpack.c.b16 %v424, %v423
    %v438 = vpack.c.b16 %v426, %v425
    %v439 = vpack.c.b16 %v428, %v427
    %v440 = vpack.c.b16 %v430, %v429
    %v441 = vpack.c.b16 %v432, %v431
    %v442 = vpack.c.b16 %v434, %v433
    %451 = vmatprep.subr.bf16.mxu0 0
    %452 = vmatpush1.bf16.msra.mxu0 %v435
    %453 = vmatprep.subr.bf16.mxu0 0
    %454 = vmatpush1.bf16.msra.mxu0 %v436
    %455 = vmatprep.subr.bf16.mxu0 0
    %456 = vmatpush1.bf16.msra.mxu0 %v437
    %457 = vmatprep.subr.bf16.mxu0 0
    %458 = vmatpush1.bf16.msra.mxu0 %v438
    %459 = vmatprep.subr.bf16.mxu0 0
    %460 = vmatpush1.bf16.msra.mxu0 %v439
    %461 = vmatprep.subr.bf16.mxu0 0
    %462 = vmatpush1.bf16.msra.mxu0 %v440
    %463 = vmatprep.subr.bf16.mxu0 0
    %464 = vmatpush1.bf16.msra.mxu0 %v441
    %465 = vmatprep.subr.bf16.mxu0 0
    %466 = vmatpush1.bf16.msra.mxu0 %v442
    %467 = vmatprep.subr.bf16.mxu0 0
    %468 = vmatpush1.bf16.msra.mxu0 0
    %469 = vmatprep.subr.bf16.mxu0 0
    %470 = vmatpush1.bf16.msra.mxu0 0
    %471 = vmatprep.subr.bf16.mxu0 0
    %472 = vmatpush1.bf16.msra.mxu0 0
    %473 = vmatprep.subr.bf16.mxu0 0
    %474 = vmatpush1.bf16.msra.mxu0 0
    %475 = vmatprep.subr.bf16.mxu0 0
    %476 = vmatpush1.bf16.msra.mxu0 0
    %477 = vmatprep.subr.bf16.mxu0 0
    %478 = vmatpush1.bf16.msra.mxu0 0
    %479 = vmatprep.subr.bf16.mxu0 0
    %480 = vmatpush1.bf16.msra.mxu0 0
    %481 = vmatprep.subr.bf16.mxu0 0
    %482 = vmatpush1.bf16.msra.mxu0 0
    %483 = vmatprep.mubr.bf16.mxu0 0
    %484 = vmatmul.mubr.bf16.gmra.mrb[0].mxu0 %v379
    %v485 = vpop.f32.mrb[0].mxu0
    %v486 = vadd.f32 %v401, %v485
    %v487 = vpop.f32.mrb[0].mxu0
    %v488 = vpop.f32.mrb[0].mxu0
    %v489 = vpop.f32.mrb[0].mxu0
    %490 = vdwg.mxu0
    %491 = vst [vmem:[#allocation10] sm:$0xff] %v486
    // Predicated region
    $region62: #{tpu_custom_call.1} parent=1 // pred_check
      _
    $region63: #{tpu_custom_call.1} parent=1 // pred_check_branch
      %493 = sbr.rel (0) target = $region65
    $region64: #{tpu_custom_call.1} parent=1 // pred_region
      %s495 = ssub.s32 128, 128
      %496 = vsyncadd [#allocation4], %s495
      %s498 = sshll.u32 [#allocation10], 4
      %s499 = int_to_ptr.vmem [resolvable:$true] %s498
      %501 = dma.vmem_to_hbm [thread:$0]  %s499, 128, %s11, [#allocation4]
    $region65: #{tpu_custom_call.1} parent=1 // pred_fallthru
      _
    // Predicated region
    $region66: #{tpu_custom_call.1} parent=1 // pred_check
      _
    $region67: #{tpu_custom_call.1} parent=1 // pred_check_branch
      %503 = sbr.rel (0) target = $region69
    $region68: #{tpu_custom_call.1} parent=1 // pred_region
      %504 = dma.done [#allocation4], 128
    $region69: #{tpu_custom_call.1} parent=1 // pred_fallthru
      _
    %505 = vsyncpa [#allocation3], 1
    %506 = vsyncpa [#allocation6], 1
    %507 = vsyncpa [#allocation9], 1
    %508 = vsyncpa [#allocation4], 1

</llo_original>
